<compile_context>
chip_gen: v6e
topology: v6e:2x2x1
jax: 0.10.0
libtpu: 0.0.40
codegen_flags: <defaults>
</compile_context>

<pallas_src>
import functools

import jax
import jax.numpy as jnp
from jax.experimental import pallas as pl
from jax.experimental.pallas import tpu as pltpu

HIDDEN = 32   # hidden_dim
POOL = 4      # maxout_pool_size


# ----------------------------------------------------------------------------
# Pallas kernel: one batch tile (bt elements, folded along lanes) per grid step
# ----------------------------------------------------------------------------
def _maxout_highway_kernel(ut_ref, rb_ref, w1_ref, w2s_ref, w12b_ref,
                           b2_ref, b12_ref, out_ref, *,
                           hidden, pool, bt, seq, seq_pad):
    hp = hidden * pool

    ut = ut_ref[...]        # (2H, bt*seq_pad)   bf16  (batch folded into lanes)
    rb = rb_ref[...]        # (H*p, bt)          f32   (r@W1r + b1 per batch)
    w1 = w1_ref[...]        # (H*p, 2H)          bf16  (maxout-1, U part, T)
    w2s = w2s_ref[...]      # (H*p + 8, H)       bf16  (W2^T with W12a^T fused)
    w12b = w12b_ref[...]    # (8, H)             bf16  (zero padded rows 4..7)
    b2 = b2_ref[...]        # (H*p, 1)           f32
    b12 = b12_ref[...]      # (8, 1)             f32   (-1e30 in padded rows)

    # ---- maxout layer 1: ONE long-N dot over the whole batch tile ----------
    m1f = jnp.dot(w1, ut, preferred_element_type=jnp.float32)      # (H*p, bt*sp)

    # Per-segment r-bias add + pool max (VPU-only; the dots stay outside).
    m1_parts = []
    for i in range(bt):                                            # bt small, static
        seg = m1f[:, i * seq_pad:(i + 1) * seq_pad] + rb[:, i:i + 1]
        mseg = seg[0:hidden]
        for j in range(1, pool):
            mseg = jnp.maximum(mseg, seg[j * hidden:(j + 1) * hidden])
        m1_parts.append(mseg.astype(w2s.dtype))                    # (H, sp) bf16
    m1 = m1_parts[0] if bt == 1 else jnp.concatenate(m1_parts, axis=-1)

    # ---- maxout layer 2 (+ fused W12a scoring rows): one dot ---------------
    m2af = jnp.dot(w2s, m1, preferred_element_type=jnp.float32)    # (H*p+8, bt*sp)
    m2f = m2af[0:hp] + b2
    m2 = m2f[0:hidden]
    for j in range(1, pool):
        m2 = jnp.maximum(m2, m2f[j * hidden:(j + 1) * hidden])     # (H, bt*sp) f32

    # ---- final maxout scoring: one small padded dot -------------------------
    af = (m2af[hp:hp + 8]
          + jnp.dot(w12b, m2.astype(w12b.dtype),
                    preferred_element_type=jnp.float32)
          + b12)                                                   # (8, bt*sp)
    scores = jnp.max(af, axis=0, keepdims=True)                    # (1, bt*sp)

    # ---- per-segment log_softmax over the real positions --------------------
    if seq != seq_pad:
        lane = jax.lax.broadcasted_iota(jnp.int32, (1, seq_pad), 1)
        pad_bias = jnp.where(lane < seq, 0.0, -1e30).astype(jnp.float32)
    else:
        pad_bias = None

    out_rows = []
    for i in range(bt):
        s = scores[:, i * seq_pad:(i + 1) * seq_pad]               # (1, sp)
        if pad_bias is not None:
            s = s + pad_bias
        mx = jnp.max(s, axis=-1, keepdims=True)
        z = s - mx
        lse = jnp.log(jnp.sum(jnp.exp(z), axis=-1, keepdims=True))
        out_rows.append(z - lse)                                   # (1, sp)
    out_blk = out_rows[0] if bt == 1 else jnp.concatenate(out_rows, axis=0)
    out_ref[...] = out_blk                                         # single full store


# ----------------------------------------------------------------------------
# Wrapper / glue
# ----------------------------------------------------------------------------
def _maxout_permutation(hidden, pool):
    # new column n = j*hidden + i  <-  old column i*pool + j
    n = jnp.arange(hidden * pool)
    return (n % hidden) * pool + n // hidden


def maxout_highway_alpha(params, h_i, U, u_cat, *, compute_dtype=jnp.bfloat16):
    """Returns log_softmax(alpha) of shape (b, m)."""
    b, m, _ = U.shape
    hidden, pool = HIDDEN, POOL
    hp = hidden * pool
    srows = ((pool + 7) // 8) * 8                       # padded scoring rows (8)
    perm = _maxout_permutation(hidden, pool)
    f32 = jnp.float32
    cdb = jnp.dtype(compute_dtype).itemsize

    # --- hoisted out of the kernel (plain XLA, whole batch at once) ----------
    r = jnp.tanh(jnp.concatenate([h_i, u_cat], axis=1) @ params["wr"])  # (b, H)

    w1p = params["w1"][:, perm]                         # pool-candidate-major cols
    b1p = params["b1"][perm]
    r_bias = (r @ w1p[2 * hidden:] + b1p).astype(f32)   # (b, H*p)

    w1u_t = w1p[:2 * hidden].T.astype(compute_dtype)                # (H*p, 2H)
    w2_t = params["w2"][:, perm].T.astype(f32)                      # (H*p, H)
    w12a_pad = jnp.zeros((srows, hidden), f32).at[:pool].set(params["w12"][:hidden].T)
    w2s = jnp.concatenate([w2_t, w12a_pad], axis=0).astype(compute_dtype)  # (H*p+8, H)
    w12b_pad = (jnp.zeros((srows, hidden), f32)
                .at[:pool].set(params["w12"][hidden:].T).astype(compute_dtype))
    b2_col = params["b2"][perm][:, None].astype(f32)                # (H*p, 1)
    b12_pad = jnp.full((srows, 1), -1e30, f32).at[:pool, 0].set(params["b12"])

    # --- tile sizing ----------------------------------------------------------
    m_pad = ((m + 127) // 128) * 128                     # lane-align positions
    bt = 8 if b >= 16 else max(1, (b + 1) // 2)          # >=2 grid steps for b>=2
    while bt > 1 and bt * m_pad > 8192:                  # bound f32 temporaries
        bt = max(1, bt // 2)
    b_pad = ((b + bt - 1) // bt) * bt
    ntiles = b_pad // bt
    lanes = bt * m_pad

    # --- fold batch into the lane axis (pure layout plumbing in XLA) ---------
    U_p = jnp.pad(U.astype(compute_dtype), ((0, b_pad - b), (0, m_pad - m), (0, 0)))
    U_fold = (U_p.reshape(ntiles, bt, m_pad, 2 * hidden)
              .transpose(0, 3, 1, 2)
              .reshape(ntiles, 2 * hidden, lanes))                  # (nt, 2H, bt*mp)

    rb_p = jnp.pad(r_bias, ((0, b_pad - b), (0, 0)))
    rb_fold = rb_p.reshape(ntiles, bt, hp).transpose(0, 2, 1)       # (nt, H*p, bt)

    kernel = functools.partial(_maxout_highway_kernel, hidden=hidden, pool=pool,
                               bt=bt, seq=m, seq_pad=m_pad)

    weight_bytes = ((hp * 2 * hidden + (hp + srows) * hidden + srows * hidden) * cdb
                    + (hp + srows) * 4)
    cost = pl.CostEstimate(
        flops=2 * b_pad * m_pad * (hp * 2 * hidden + (hp + srows) * hidden
                                   + srows * hidden),
        transcendentals=b_pad * m_pad,
        bytes_accessed=int(b_pad * m_pad * 2 * hidden * cdb       # U^T (folded)
                           + b_pad * hp * 4                       # r-bias
                           + b_pad * m_pad * 4                    # output
                           + weight_bytes))

    # Rough per-step VMEM estimate; raise the scoped limit only when needed.
    vmem_est = (2 * (2 * hidden * lanes * cdb)                    # U tile x2 bufs
                + 2 * (hp * bt * 4) + 2 * (bt * m_pad * 4)        # rb / out x2
                + weight_bytes
                + lanes * ((hp + (hp + srows)) * 4                # m1f + m2af f32
                           + hidden * (cdb + 4)                   # m1 bf16 + m2 f32
                           + srows * 4 + 8))
    vmem_limit = None
    if vmem_est > 12 * (1 << 20):
        # TODO(synk): for very long documents add an m-tile grid axis with an
        # online softmax instead of just raising the limit; re-derive the
        # budget for v7x's 64 MiB physical VMEM.
        vmem_limit = int(min(vmem_est * 1.4, 64 * (1 << 20)))

    alpha = pl.pallas_call(
        kernel,
        out_shape=jax.ShapeDtypeStruct((ntiles, bt, m_pad), jnp.float32),
        grid=(ntiles,),
        in_specs=[
            pl.BlockSpec((None, 2 * hidden, lanes), lambda g: (g, 0, 0)),  # U fold
            pl.BlockSpec((None, hp, bt), lambda g: (g, 0, 0)),             # r-bias
            pl.BlockSpec((hp, 2 * hidden), lambda g: (0, 0)),              # W1u^T
            pl.BlockSpec((hp + srows, hidden), lambda g: (0, 0)),          # W2^T|W12a^T
            pl.BlockSpec((srows, hidden), lambda g: (0, 0)),               # W12b^T pad
            pl.BlockSpec((hp, 1), lambda g: (0, 0)),                       # b2
            pl.BlockSpec((srows, 1), lambda g: (0, 0)),                    # b12 pad
        ],
        out_specs=pl.BlockSpec((None, bt, m_pad), lambda g: (g, 0, 0)),
        compiler_params=pltpu.CompilerParams(
            dimension_semantics=("parallel",),
            vmem_limit_bytes=vmem_limit),
        cost_estimate=cost,
    )(U_fold, rb_fold, w1u_t, w2s, w12b_pad, b2_col, b12_pad)

    return alpha.reshape(b_pad, m_pad)[:b, :m]                     # (b, m)


def max_out_highway_forward(params, h_i, U, curr_mask, idx_i_1, u_cat,
                            mask_mult=None, target=None):
    """Mirrors MaxOutHighway.forward. (mask_mult is unused, as in the ref.)"""
    b, m, _ = U.shape
    h_i = h_i.reshape(-1, HIDDEN)

    alpha = maxout_highway_alpha(params, h_i, U, u_cat)  # log_softmax, (b, m)

    idx_i = jnp.argmax(alpha, axis=1).astype(jnp.int32)
    if curr_mask is None:
        curr_mask = idx_i == idx_i                       # all True
    else:
        idx_i = idx_i * curr_mask.astype(jnp.int32)
        idx_i_1 = idx_i_1 * curr_mask.astype(jnp.int32)
        curr_mask = idx_i != idx_i_1

    step_loss = None
    if target is not None:
        # nn.CrossEntropyLoss re-applies log_softmax to the (already
        # log-softmaxed) alpha -- faithful to the reference implementation.
        # TODO(synk): target.to('cpu') device move has no JAX equivalent; skipped.
        ls2 = alpha - jax.scipy.special.logsumexp(alpha, axis=1, keepdims=True)
        loss = -jnp.mean(ls2[jnp.arange(b), target])
        step_loss = loss * curr_mask.astype(jnp.float32)

    return idx_i, curr_mask, step_loss


# ----------------------------------------------------------------------------
# Deterministic parameter init (PyTorch nn.Linear-style uniform fan-in init)
# ----------------------------------------------------------------------------
def init_params(key, hidden=HIDDEN, pool=POOL):
    ks = jax.random.split(key, 7)

    def w(k, fan_in, fan_out):
        bound = 1.0 / jnp.sqrt(jnp.float32(fan_in))
        return jax.random.uniform(k, (fan_in, fan_out), jnp.float32, -bound, bound)

    def bias(k, fan_in, fan_out):
        bound = 1.0 / jnp.sqrt(jnp.float32(fan_in))
        return jax.random.uniform(k, (fan_out,), jnp.float32, -bound, bound)

    return dict(
        wr=w(ks[0], 5 * hidden, hidden),                       # r: no bias
        w1=w(ks[1], 3 * hidden, hidden * pool),
        b1=bias(ks[2], 3 * hidden, hidden * pool),
        w2=w(ks[3], hidden, hidden * pool),
        b2=bias(ks[4], hidden, hidden * pool),
        w12=w(ks[5], 2 * hidden, pool),
        b12=bias(ks[6], 2 * hidden, pool),
    )


# ----------------------------------------------------------------------------
# Pure-JAX reference of the PyTorch forward.  With compute_dtype=bfloat16 it
# mirrors the kernel's precision (bf16 matmul inputs, f32 accumulation and
# f32 elementwise math); with float32 it is the literal fp32 reference.
# ----------------------------------------------------------------------------
def reference_alpha(params, h_i, U, u_cat, compute_dtype=jnp.float32):
    b, m, _ = U.shape
    H, P = HIDDEN, POOL
    f32 = jnp.float32
    cd = compute_dtype

    r = jnp.tanh(jnp.concatenate([h_i, u_cat], axis=1) @ params["wr"])   # (b, H)
    r_bias = r @ params["w1"][2 * H:] + params["b1"]                     # (b, H*P)

    u_part = jnp.dot(U.astype(cd).reshape(b * m, 2 * H),
                     params["w1"][:2 * H].astype(cd),
                     preferred_element_type=f32)                         # (b*m, H*P)
    m1 = (u_part.reshape(b, m, H * P) + r_bias[:, None, :]).reshape(b * m, H * P)
    m1 = m1.reshape(-1, H, P).max(2)                                     # (b*m, H)

    m2 = jnp.dot(m1.astype(cd), params["w2"].astype(cd),
                 preferred_element_type=f32) + params["b2"]
    m2 = m2.reshape(-1, H, P).max(2)                                     # (b*m, H)

    a = (jnp.dot(m1.astype(cd), params["w12"][:H].astype(cd), preferred_element_type=f32)
         + jnp.dot(m2.astype(cd), params["w12"][H:].astype(cd), preferred_element_type=f32)
         + params["b12"]).max(1)
    a = a.reshape(b, m)
    return a - jax.scipy.special.logsumexp(a, axis=1, keepdims=True)


if __name__ == "__main__":
    b, m = 2, 8
    key = jax.random.PRNGKey(0)
    k_p, k_h, k_u, k_uc, k_t = jax.random.split(key, 5)

    params = init_params(k_p)
    h_i = jax.random.normal(k_h, (b, HIDDEN), jnp.float32)
    U = jax.random.normal(k_u, (b, m, 2 * HIDDEN), jnp.float32)
    u_cat = jax.random.normal(k_uc, (b, 4 * HIDDEN), jnp.float32)
    idx_i_1 = jnp.zeros((b,), jnp.int32)
    target = jax.random.randint(k_t, (b,), 0, m, jnp.int32)

    idx_i, curr_mask, step_loss = max_out_highway_forward(
        params, h_i, U, curr_mask=None, idx_i_1=idx_i_1, u_cat=u_cat,
        mask_mult=None, target=target)
    jax.block_until_ready((idx_i, curr_mask, step_loss))

    # correctness checks
    alpha_kernel = maxout_highway_alpha(params, h_i, U, u_cat)
    alpha_match = reference_alpha(params, h_i, U, u_cat, compute_dtype=jnp.bfloat16)
    alpha_f32 = reference_alpha(params, h_i, U, u_cat, compute_dtype=jnp.float32)

    # precision-matched reference (bf16 matmul inputs): tight tolerance
    assert jnp.allclose(alpha_kernel, alpha_match, atol=5e-3, rtol=5e-3), (
        alpha_kernel, alpha_match)
    # full-f32 reference: loose tolerance (bf16 quantization of U / weights)
    assert jnp.allclose(alpha_kernel, alpha_f32, atol=5e-2, rtol=5e-2), (
        alpha_kernel, alpha_f32)
    assert jnp.array_equal(idx_i, jnp.argmax(alpha_match, axis=1).astype(jnp.int32))

    print("KERNEL_OK")
</pallas_src>

<mosaic_0001>
module attributes {stable_mosaic.version = 11 : i64} {
  func.func @_maxout_highway_kernel(%arg0: i32, %arg1: memref<1x64x128xbf16, #tpu.memory_space<vmem>>, %arg2: memref<1x128x1xf32, #tpu.memory_space<vmem>>, %arg3: memref<128x64xbf16, #tpu.memory_space<vmem>>, %arg4: memref<136x32xbf16, #tpu.memory_space<vmem>>, %arg5: memref<8x32xbf16, #tpu.memory_space<vmem>>, %arg6: memref<128x1xf32, #tpu.memory_space<vmem>>, %arg7: memref<8x1xf32, #tpu.memory_space<vmem>>, %arg8: memref<1x1x128xf32, #tpu.memory_space<vmem>>) attributes {dimension_semantics = [#tpu.dimension_semantics<parallel>], iteration_bounds = array<i64: 2>, scalar_prefetch = 0 : i64, scratch_operands = 0 : i64, tpu.core_type = #tpu.core_type<tc>, window_params = [{transform_indices = @transform_0, window_bounds = array<i64: 1, 64, 128>}, {transform_indices = @transform_1, window_bounds = array<i64: 1, 128, 1>}, {pipeline_mode = #tpu.pipeline_mode<synchronous>, transform_indices = @transform_2, window_bounds = array<i64: 128, 64>}, {pipeline_mode = #tpu.pipeline_mode<synchronous>, transform_indices = @transform_3, window_bounds = array<i64: 136, 32>}, {pipeline_mode = #tpu.pipeline_mode<synchronous>, transform_indices = @transform_4, window_bounds = array<i64: 8, 32>}, {pipeline_mode = #tpu.pipeline_mode<synchronous>, transform_indices = @transform_5, window_bounds = array<i64: 128, 1>}, {pipeline_mode = #tpu.pipeline_mode<synchronous>, transform_indices = @transform_6, window_bounds = array<i64: 8, 1>}, {transform_indices = @transform_7, window_bounds = array<i64: 1, 1, 128>}]} {
    %c0 = arith.constant 0 : index
    %c0_0 = arith.constant 0 : index
    %c0_1 = arith.constant 0 : index
    %0 = vector.load %arg1[%c0, %c0_0, %c0_1] : memref<1x64x128xbf16, #tpu.memory_space<vmem>>, vector<1x64x128xbf16>
    %1 = vector.shape_cast %0 : vector<1x64x128xbf16> to vector<64x128xbf16>
    %c0_2 = arith.constant 0 : index
    %c0_3 = arith.constant 0 : index
    %c0_4 = arith.constant 0 : index
    %2 = vector.load %arg2[%c0_2, %c0_3, %c0_4] : memref<1x128x1xf32, #tpu.memory_space<vmem>>, vector<1x128x1xf32>
    %3 = vector.shape_cast %2 : vector<1x128x1xf32> to vector<128x1xf32>
    %c0_5 = arith.constant 0 : index
    %c0_6 = arith.constant 0 : index
    %4 = vector.load %arg3[%c0_5, %c0_6] : memref<128x64xbf16, #tpu.memory_space<vmem>>, vector<128x64xbf16>
    %c0_7 = arith.constant 0 : index
    %c0_8 = arith.constant 0 : index
    %5 = vector.load %arg4[%c0_7, %c0_8] : memref<136x32xbf16, #tpu.memory_space<vmem>>, vector<136x32xbf16>
    %c0_9 = arith.constant 0 : index
    %c0_10 = arith.constant 0 : index
    %6 = vector.load %arg5[%c0_9, %c0_10] : memref<8x32xbf16, #tpu.memory_space<vmem>>, vector<8x32xbf16>
    %c0_11 = arith.constant 0 : index
    %c0_12 = arith.constant 0 : index
    %7 = vector.load %arg6[%c0_11, %c0_12] : memref<128x1xf32, #tpu.memory_space<vmem>>, vector<128x1xf32>
    %c0_13 = arith.constant 0 : index
    %c0_14 = arith.constant 0 : index
    %8 = vector.load %arg7[%c0_13, %c0_14] : memref<8x1xf32, #tpu.memory_space<vmem>>, vector<8x1xf32>
    %cst = arith.constant dense<0.000000e+00> : vector<128x128xf32>
    %9 = tpu.matmul %4, %1, %cst {dimension_numbers = #tpu.dot_dimension_numbers<[1], [0], [0], [1], [0, 0, 1, 1], [], []>} : vector<128x64xbf16>, vector<64x128xbf16>, vector<128x128xf32> -> vector<128x128xf32>
    %10 = vector.broadcast %3 : vector<128x1xf32> to vector<128x128xf32>
    %11 = arith.addf %9, %10 : vector<128x128xf32>
    %12 = vector.extract_strided_slice %11 {offsets = [0, 0], sizes = [32, 128], strides = [1, 1]} : vector<128x128xf32> to vector<32x128xf32>
    %13 = vector.extract_strided_slice %11 {offsets = [32, 0], sizes = [32, 128], strides = [1, 1]} : vector<128x128xf32> to vector<32x128xf32>
    %14 = arith.maximumf %12, %13 : vector<32x128xf32>
    %15 = vector.extract_strided_slice %11 {offsets = [64, 0], sizes = [32, 128], strides = [1, 1]} : vector<128x128xf32> to vector<32x128xf32>
    %16 = arith.maximumf %14, %15 : vector<32x128xf32>
    %17 = vector.extract_strided_slice %11 {offsets = [96, 0], sizes = [32, 128], strides = [1, 1]} : vector<128x128xf32> to vector<32x128xf32>
    %18 = arith.maximumf %16, %17 : vector<32x128xf32>
    %19 = arith.truncf %18 : vector<32x128xf32> to vector<32x128xbf16>
    %cst_15 = arith.constant dense<0.000000e+00> : vector<136x128xf32>
    %20 = tpu.matmul %5, %19, %cst_15 {dimension_numbers = #tpu.dot_dimension_numbers<[1], [0], [0], [1], [0, 0, 1, 1], [], []>} : vector<136x32xbf16>, vector<32x128xbf16>, vector<136x128xf32> -> vector<136x128xf32>
    %21 = vector.extract_strided_slice %20 {offsets = [0, 0], sizes = [128, 128], strides = [1, 1]} : vector<136x128xf32> to vector<128x128xf32>
    %22 = vector.broadcast %7 : vector<128x1xf32> to vector<128x128xf32>
    %23 = arith.addf %21, %22 : vector<128x128xf32>
    %24 = vector.extract_strided_slice %23 {offsets = [0, 0], sizes = [32, 128], strides = [1, 1]} : vector<128x128xf32> to vector<32x128xf32>
    %25 = vector.extract_strided_slice %23 {offsets = [32, 0], sizes = [32, 128], strides = [1, 1]} : vector<128x128xf32> to vector<32x128xf32>
    %26 = arith.maximumf %24, %25 : vector<32x128xf32>
    %27 = vector.extract_strided_slice %23 {offsets = [64, 0], sizes = [32, 128], strides = [1, 1]} : vector<128x128xf32> to vector<32x128xf32>
    %28 = arith.maximumf %26, %27 : vector<32x128xf32>
    %29 = vector.extract_strided_slice %23 {offsets = [96, 0], sizes = [32, 128], strides = [1, 1]} : vector<128x128xf32> to vector<32x128xf32>
    %30 = arith.maximumf %28, %29 : vector<32x128xf32>
    %31 = vector.extract_strided_slice %20 {offsets = [128, 0], sizes = [8, 128], strides = [1, 1]} : vector<136x128xf32> to vector<8x128xf32>
    %32 = arith.truncf %30 : vector<32x128xf32> to vector<32x128xbf16>
    %cst_16 = arith.constant dense<0.000000e+00> : vector<8x128xf32>
    %33 = tpu.matmul %6, %32, %cst_16 {dimension_numbers = #tpu.dot_dimension_numbers<[1], [0], [0], [1], [0, 0, 1, 1], [], []>} : vector<8x32xbf16>, vector<32x128xbf16>, vector<8x128xf32> -> vector<8x128xf32>
    %34 = arith.addf %31, %33 : vector<8x128xf32>
    %35 = vector.broadcast %8 : vector<8x1xf32> to vector<8x128xf32>
    %36 = arith.addf %34, %35 : vector<8x128xf32>
    %cst_17 = arith.constant dense<0xFF800000> : vector<128xf32>
    %37 = vector.multi_reduction <maximumf>, %36, %cst_17 [0] : vector<8x128xf32> to vector<128xf32>
    %38 = vector.shape_cast %37 : vector<128xf32> to vector<1x128xf32>
    %39 = tpu.iota {dimensions = array<i32: 1>} : vector<1x128xi32>
    %c8_i32 = arith.constant 8 : i32
    %40 = vector.broadcast %c8_i32 : i32 to vector<1x128xi32>
    %41 = arith.cmpi slt, %39, %40 : vector<1x128xi32>
    %cst_18 = arith.constant 0.000000e+00 : f32
    %cst_19 = arith.constant -1.000000e+30 : f32
    %42 = vector.broadcast %cst_18 : f32 to vector<1x128xf32>
    %43 = vector.broadcast %cst_19 : f32 to vector<1x128xf32>
    %44 = arith.select %41, %42, %43 : vector<1x128xi1>, vector<1x128xf32>
    %45 = arith.addf %38, %44 : vector<1x128xf32>
    %cst_20 = arith.constant dense<0xFF800000> : vector<1xf32>
    %46 = vector.multi_reduction <maximumf>, %45, %cst_20 [1] : vector<1x128xf32> to vector<1xf32>
    %47 = vector.shape_cast %46 : vector<1xf32> to vector<1x1xf32>
    %48 = vector.broadcast %47 : vector<1x1xf32> to vector<1x128xf32>
    %49 = arith.subf %45, %48 : vector<1x128xf32>
    %50 = math.exp %49 : vector<1x128xf32>
    %cst_21 = arith.constant dense<0.000000e+00> : vector<1xf32>
    %51 = vector.multi_reduction <add>, %50, %cst_21 [1] : vector<1x128xf32> to vector<1xf32>
    %52 = vector.shape_cast %51 : vector<1xf32> to vector<1x1xf32>
    %53 = math.log %52 : vector<1x1xf32>
    %54 = vector.broadcast %53 : vector<1x1xf32> to vector<1x128xf32>
    %55 = arith.subf %49, %54 : vector<1x128xf32>
    %c0_22 = arith.constant 0 : index
    %c0_23 = arith.constant 0 : index
    %c0_24 = arith.constant 0 : index
    %56 = vector.load %arg8[%c0_22, %c0_23, %c0_24] : memref<1x1x128xf32, #tpu.memory_space<vmem>>, vector<1x1x128xf32>
    %57 = vector.shape_cast %56 : vector<1x1x128xf32> to vector<1x128xf32>
    %58 = vector.shape_cast %55 : vector<1x128xf32> to vector<1x1x128xf32>
    tpu.vector_store %arg8[%c0_22, %c0_23, %c0_24], %58 {strides = array<i32>} : memref<1x1x128xf32, #tpu.memory_space<vmem>>, vector<1x1x128xf32>,
    return
  }
  func.func @transform_0(%arg0: i32) -> (i32, i32, i32) {
    %c0_i32 = arith.constant 0 : i32
    %c0_i32_0 = arith.constant 0 : i32
    %c0_i32_1 = arith.constant 0 : i32
    return %arg0, %c0_i32, %c0_i32_0 : i32, i32, i32
  }
  func.func @transform_1(%arg0: i32) -> (i32, i32, i32) {
    %c0_i32 = arith.constant 0 : i32
    %c0_i32_0 = arith.constant 0 : i32
    %c0_i32_1 = arith.constant 0 : i32
    return %arg0, %c0_i32, %c0_i32_0 : i32, i32, i32
  }
  func.func @transform_2(%arg0: i32) -> (i32, i32) {
    %c0_i32 = arith.constant 0 : i32
    %c0_i32_0 = arith.constant 0 : i32
    %c0_i32_1 = arith.constant 0 : i32
    return %c0_i32, %c0_i32_0 : i32, i32
  }
  func.func @transform_3(%arg0: i32) -> (i32, i32) {
    %c0_i32 = arith.constant 0 : i32
    %c0_i32_0 = arith.constant 0 : i32
    %c0_i32_1 = arith.constant 0 : i32
    return %c0_i32, %c0_i32_0 : i32, i32
  }
  func.func @transform_4(%arg0: i32) -> (i32, i32) {
    %c0_i32 = arith.constant 0 : i32
    %c0_i32_0 = arith.constant 0 : i32
    %c0_i32_1 = arith.constant 0 : i32
    return %c0_i32, %c0_i32_0 : i32, i32
  }
  func.func @transform_5(%arg0: i32) -> (i32, i32) {
    %c0_i32 = arith.constant 0 : i32
    %c0_i32_0 = arith.constant 0 : i32
    %c0_i32_1 = arith.constant 0 : i32
    return %c0_i32, %c0_i32_0 : i32, i32
  }
  func.func @transform_6(%arg0: i32) -> (i32, i32) {
    %c0_i32 = arith.constant 0 : i32
    %c0_i32_0 = arith.constant 0 : i32
    %c0_i32_1 = arith.constant 0 : i32
    return %c0_i32, %c0_i32_0 : i32, i32
  }
  func.func @transform_7(%arg0: i32) -> (i32, i32, i32) {
    %c0_i32 = arith.constant 0 : i32
    %c0_i32_0 = arith.constant 0 : i32
    %c0_i32_1 = arith.constant 0 : i32
    return %arg0, %c0_i32, %c0_i32_0 : i32, i32, i32
  }
}

</mosaic_0001>

<llo_original>
// kernel: tpu_custom_call.1
$region0: #{tpu_custom_call.1}
  #allocation0 [shape = 'u32[]', space=smem, size = 0x4, offset = 0x4, fixed_abs, tag = 'smem constant byte address 0x4 - core index']
  #allocation1 [shape = 'u32[144,128]{1,0:T(1,128)}', space=vmem, size = 0x12000, scoped, tag = 'internal scratch']
  %s0 = inlined_call_operand.vmem [shape: bf16[2,64,128], index: 0, kind: input, shape index: {}]
  %s1 = inlined_call_operand.vmem [shape: f32[2,128,1], index: 1, kind: input, shape index: {}]
  %s2 = inlined_call_operand.vmem [shape: bf16[128,64], index: 2, kind: input, shape index: {}]
  %s3 = inlined_call_operand.vmem [shape: bf16[136,32], index: 3, kind: input, shape index: {}]
  %s4 = inlined_call_operand.vmem [shape: bf16[8,32], index: 4, kind: input, shape index: {}]
  %s5 = inlined_call_operand.vmem [shape: f32[128,1], index: 5, kind: input, shape index: {}]
  %s6 = inlined_call_operand.vmem [shape: f32[8,1], index: 6, kind: input, shape index: {}]
  %s7 = inlined_call_operand.hbm [shape: f32[2,1,128], index: 7, kind: output, shape index: {}]
  %s8 = sld [smem:[#allocation0]]
  $region61: #{tpu_custom_call.1} parent=0
    _
  %s10 = ssub.s32 1, %s8
  %s11 = scalar_select 0, %s10, %s8
  $region1: #{tpu_custom_call.1} parent=0
    #allocation2 [shape = 'u8[1024]{0}', space=vmem, size = 0x400, scoped, tag = 'output window, operand 0']
    #allocation3 [shape = 's32[2]{0}', space=sflag, size = 0x8, scoped, tag = 'scoped memory for tpu_custom_call.1']
    %12 = vsyncpa [#allocation3], 0
    %s13 = scalar_lea.sflag [#allocation3], 1
    %14 = vsyncpa %s13, 0
    loop: start=0, step=1, limit=4
    $region2: #{tpu_custom_call.1} parent=1 // loop_pre_header
      _
    $region3: #{tpu_custom_call.1} parent=1 // loop_header
      %s16 = sphi 0, %s20
      %p17 = scmp.ge.s32.totalorder %s16, 4
      %s26 = sphi 0, %s28
      %s29 = sphi 0, %s26
      %s30 = sphi 0, %s29
      %s46 = sphi 0, %s30
      %s52 = sphi 0, %s54
      %s55 = sphi 0, %s52
      %s56 = sphi 0, %s55
      %s72 = sphi 0, %s56
      %s76 = sphi 0, %s76
      %s78 = sphi 0, %s76
      %s79 = sphi 0, %s78
      %s93 = sphi 0, %s79
      %s97 = sphi 0, %s97
      %s99 = sphi 0, %s97
      %s100 = sphi 0, %s99
      %s114 = sphi 0, %s100
      %s118 = sphi 0, %s118
      %s120 = sphi 0, %s118
      %s121 = sphi 0, %s120
      %s135 = sphi 0, %s121
      %s139 = sphi 0, %s139
      %s141 = sphi 0, %s139
      %s142 = sphi 0, %s141
      %s156 = sphi 0, %s142
      %s160 = sphi 0, %s160
      %s162 = sphi 0, %s160
      %s163 = sphi 0, %s162
      %s177 = sphi 0, %s163
      %s183 = sphi 0, %s185
      %s186 = sphi 0, %s183
      %s187 = sphi 0, %s186
      %s203 = sphi 0, %s187
    $region4: #{tpu_custom_call.1} parent=1 // loop_header_branch
      %19 = sbr.rel (%p17) target = $region8
    $region5: #{tpu_custom_call.1} parent=1 // loop_body
      %s21 = ssub.s32 %s16, 1
      %s22 = ssub.s32 %s16, 2
      %s23 = sadd.s32 %s16, 1
      %s24 = ssub.s32 %s16, %s23
      %p25 = scmp.eq.s32.totalorder %s24, 0
      %s27 = sadd.s32 %s26, 1
      %s28 = scalar_select %p25, %s26, %s27
      %p31 = pneg %p25
      %p32 = scmp.eq.s32.totalorder %s16, 1
      %p33 = por %p31, %p32
      %p34 = scmp.ne.s32.totalorder %s26, %s29
      %p35 = scmp.eq.s32.totalorder %s16, 0
      %p36 = por %p34, %p35
      %p37 = scmp.ne.s32.totalorder %s26, %s29
      %p38 = scmp.eq.s32.totalorder %s21, 1
      %p39 = por %p37, %p38
      %p40 = scmp.ne.s32.totalorder %s29, %s30
      %p41 = scmp.eq.s32.totalorder %s21, 0
      %p42 = por %p40, %p41
      %p43 = scmp.ne.s32.totalorder %s29, %s30
      %p44 = scmp.eq.s32.totalorder %s22, 1
      %p45 = por %p43, %p44
      %p47 = scmp.ne.s32.totalorder %s30, %s46
      %p48 = scmp.eq.s32.totalorder %s22, 0
      %p49 = por %p47, %p48
      %s50 = ssub.s32 %s16, %s23
      %p51 = scmp.eq.s32.totalorder %s50, 0
      %s53 = sadd.s32 %s52, 1
      %s54 = scalar_select %p51, %s52, %s53
      %p57 = pneg %p51
      %p58 = scmp.eq.s32.totalorder %s16, 1
      %p59 = por %p57, %p58
      %p60 = scmp.ne.s32.totalorder %s52, %s55
      %p61 = scmp.eq.s32.totalorder %s16, 0
      %p62 = por %p60, %p61
      %p63 = scmp.ne.s32.totalorder %s52, %s55
      %p64 = scmp.eq.s32.totalorder %s21, 1
      %p65 = por %p63, %p64
      %p66 = scmp.ne.s32.totalorder %s55, %s56
      %p67 = scmp.eq.s32.totalorder %s21, 0
      %p68 = por %p66, %p67
      %p69 = scmp.ne.s32.totalorder %s55, %s56
      %p70 = scmp.eq.s32.totalorder %s22, 1
      %p71 = por %p69, %p70
      %p73 = scmp.ne.s32.totalorder %s56, %s72
      %p74 = scmp.eq.s32.totalorder %s22, 0
      %p75 = por %p73, %p74
      %s77 = sadd.s32 %s76, 1
      %p80 = scmp.eq.s32.totalorder %s16, 1
      %p81 = scmp.ne.s32.totalorder %s76, %s78
      %p82 = scmp.eq.s32.totalorder %s16, 0
      %p83 = por %p81, %p82
      %p84 = scmp.ne.s32.totalorder %s76, %s78
      %p85 = scmp.eq.s32.totalorder %s21, 1
      %p86 = por %p84, %p85
      %p87 = scmp.ne.s32.totalorder %s78, %s79
      %p88 = scmp.eq.s32.totalorder %s21, 0
      %p89 = por %p87, %p88
      %p90 = scmp.ne.s32.totalorder %s78, %s79
      %p91 = scmp.eq.s32.totalorder %s22, 1
      %p92 = por %p90, %p91
      %p94 = scmp.ne.s32.totalorder %s79, %s93
      %p95 = scmp.eq.s32.totalorder %s22, 0
      %p96 = por %p94, %p95
      %s98 = sadd.s32 %s97, 1
      %p101 = scmp.eq.s32.totalorder %s16, 1
      %p102 = scmp.ne.s32.totalorder %s97, %s99
      %p103 = scmp.eq.s32.totalorder %s16, 0
      %p104 = por %p102, %p103
      %p105 = scmp.ne.s32.totalorder %s97, %s99
      %p106 = scmp.eq.s32.totalorder %s21, 1
      %p107 = por %p105, %p106
      %p108 = scmp.ne.s32.totalorder %s99, %s100
      %p109 = scmp.eq.s32.totalorder %s21, 0
      %p110 = por %p108, %p109
      %p111 = scmp.ne.s32.totalorder %s99, %s100
      %p112 = scmp.eq.s32.totalorder %s22, 1
      %p113 = por %p111, %p112
      %p115 = scmp.ne.s32.totalorder %s100, %s114
      %p116 = scmp.eq.s32.totalorder %s22, 0
      %p117 = por %p115, %p116
      %s119 = sadd.s32 %s118, 1
      %p122 = scmp.eq.s32.totalorder %s16, 1
      %p123 = scmp.ne.s32.totalorder %s118, %s120
      %p124 = scmp.eq.s32.totalorder %s16, 0
      %p125 = por %p123, %p124
      %p126 = scmp.ne.s32.totalorder %s118, %s120
      %p127 = scmp.eq.s32.totalorder %s21, 1
      %p128 = por %p126, %p127
      %p129 = scmp.ne.s32.totalorder %s120, %s121
      %p130 = scmp.eq.s32.totalorder %s21, 0
      %p131 = por %p129, %p130
      %p132 = scmp.ne.s32.totalorder %s120, %s121
      %p133 = scmp.eq.s32.totalorder %s22, 1
      %p134 = por %p132, %p133
      %p136 = scmp.ne.s32.totalorder %s121, %s135
      %p137 = scmp.eq.s32.totalorder %s22, 0
      %p138 = por %p136, %p137
      %s140 = sadd.s32 %s139, 1
      %p143 = scmp.eq.s32.totalorder %s16, 1
      %p144 = scmp.ne.s32.totalorder %s139, %s141
      %p145 = scmp.eq.s32.totalorder %s16, 0
      %p146 = por %p144, %p145
      %p147 = scmp.ne.s32.totalorder %s139, %s141
      %p148 = scmp.eq.s32.totalorder %s21, 1
      %p149 = por %p147, %p148
      %p150 = scmp.ne.s32.totalorder %s141, %s142
      %p151 = scmp.eq.s32.totalorder %s21, 0
      %p152 = por %p150, %p151
      %p153 = scmp.ne.s32.totalorder %s141, %s142
      %p154 = scmp.eq.s32.totalorder %s22, 1
      %p155 = por %p153, %p154
      %p157 = scmp.ne.s32.totalorder %s142, %s156
      %p158 = scmp.eq.s32.totalorder %s22, 0
      %p159 = por %p157, %p158
      %s161 = sadd.s32 %s160, 1
      %p164 = scmp.eq.s32.totalorder %s16, 1
      %p165 = scmp.ne.s32.totalorder %s160, %s162
      %p166 = scmp.eq.s32.totalorder %s16, 0
      %p167 = por %p165, %p166
      %p168 = scmp.ne.s32.totalorder %s160, %s162
      %p169 = scmp.eq.s32.totalorder %s21, 1
      %p170 = por %p168, %p169
      %p171 = scmp.ne.s32.totalorder %s162, %s163
      %p172 = scmp.eq.s32.totalorder %s21, 0
      %p173 = por %p171, %p172
      %p174 = scmp.ne.s32.totalorder %s162, %s163
      %p175 = scmp.eq.s32.totalorder %s22, 1
      %p176 = por %p174, %p175
      %p178 = scmp.ne.s32.totalorder %s163, %s177
      %p179 = scmp.eq.s32.totalorder %s22, 0
      %p180 = por %p178, %p179
      %s181 = ssub.s32 %s16, %s23
      %p182 = scmp.eq.s32.totalorder %s181, 0
      %s184 = sadd.s32 %s183, 1
      %s185 = scalar_select %p182, %s183, %s184
      %p188 = pneg %p182
      %p189 = scmp.eq.s32.totalorder %s16, 1
      %p190 = por %p188, %p189
      %p191 = scmp.ne.s32.totalorder %s183, %s186
      %p192 = scmp.eq.s32.totalorder %s16, 0
      %p193 = por %p191, %p192
      %p194 = scmp.ne.s32.totalorder %s183, %s186
      %p195 = scmp.eq.s32.totalorder %s21, 1
      %p196 = por %p194, %p195
      %p197 = scmp.ne.s32.totalorder %s186, %s187
      %p198 = scmp.eq.s32.totalorder %s21, 0
      %p199 = por %p197, %p198
      %p200 = scmp.ne.s32.totalorder %s186, %s187
      %p201 = scmp.eq.s32.totalorder %s22, 1
      %p202 = por %p200, %p201
      %p204 = scmp.ne.s32.totalorder %s187, %s203
      %p205 = scmp.eq.s32.totalorder %s22, 0
      %p206 = por %p204, %p205
      %p207 = scmp.le.s32.totalorder 1, %s16
      %p208 = scmp.lt.s32.totalorder %s16, 3
      %p209 = pnand %p207, %p208
      %p210 = pneg %p209
      // Predicated region
      $region9: #{tpu_custom_call.1} parent=5 // pred_check
        _
      $region10: #{tpu_custom_call.1} parent=5 // pred_check_branch
        %212 = sbr.rel (%p209) target = $region12
      $region11: #{tpu_custom_call.1} parent=5 // pred_region
        %s213 = ssub.s32 %s16, 1
        // Predicated region
        $region13: #{tpu_custom_call.1} parent=11 // pred_check
          %p214 = pneg %p89
        $region14: #{tpu_custom_call.1} parent=11 // pred_check_branch
          %216 = sbr.rel (%p214) target = $region16
        $region15: #{tpu_custom_call.1} parent=11 // pred_region
          _
        $region16: #{tpu_custom_call.1} parent=11 // pred_fallthru
          _
        // Predicated region
        $region17: #{tpu_custom_call.1} parent=11 // pred_check
          %p217 = pneg %p110
        $region18: #{tpu_custom_call.1} parent=11 // pred_check_branch
          %219 = sbr.rel (%p217) target = $region20
        $region19: #{tpu_custom_call.1} parent=11 // pred_region
          _
        $region20: #{tpu_custom_call.1} parent=11 // pred_fallthru
          _
        // Predicated region
        $region21: #{tpu_custom_call.1} parent=11 // pred_check
          %p220 = pneg %p131
        $region22: #{tpu_custom_call.1} parent=11 // pred_check_branch
          %222 = sbr.rel (%p220) target = $region24
        $region23: #{tpu_custom_call.1} parent=11 // pred_region
          _
        $region24: #{tpu_custom_call.1} parent=11 // pred_fallthru
          _
        // Predicated region
        $region25: #{tpu_custom_call.1} parent=11 // pred_check
          %p223 = pneg %p152
        $region26: #{tpu_custom_call.1} parent=11 // pred_check_branch
          %225 = sbr.rel (%p223) target = $region28
        $region27: #{tpu_custom_call.1} parent=11 // pred_region
          _
        $region28: #{tpu_custom_call.1} parent=11 // pred_fallthru
          _
        // Predicated region
        $region29: #{tpu_custom_call.1} parent=11 // pred_check
          %p226 = pneg %p173
        $region30: #{tpu_custom_call.1} parent=11 // pred_check_branch
          %228 = sbr.rel (%p226) target = $region32
        $region31: #{tpu_custom_call.1} parent=11 // pred_region
          _
        $region32: #{tpu_custom_call.1} parent=11 // pred_fallthru
          _
      $region12: #{tpu_custom_call.1} parent=5 // pred_fallthru
        _
      %p229 = scmp.lt.s32.totalorder %s16, 2
      // Predicated region
      $region33: #{tpu_custom_call.1} parent=5 // pred_check
        %p230 = pneg %p229
      $region34: #{tpu_custom_call.1} parent=5 // pred_check_branch
        %232 = sbr.rel (%p230) target = $region36
      $region35: #{tpu_custom_call.1} parent=5 // pred_region
        // Predicated region
        $region37: #{tpu_custom_call.1} parent=35 // pred_check
          %p233 = pneg %p36
        $region38: #{tpu_custom_call.1} parent=35 // pred_check_branch
          %235 = sbr.rel (%p233) target = $region40
        $region39: #{tpu_custom_call.1} parent=35 // pred_region
          %p236 = scmp.lt.s32.totalorder %s16, 1
          %s237 = scalar_select %p236, %s16, 1
          %s238 = smul.addr %s237, 8
          %s239 = smul.addr %s238, 4
          %s240 = scalar_lea.vmem %s0, %s239
        $region40: #{tpu_custom_call.1} parent=35 // pred_fallthru
          _
        // Predicated region
        $region41: #{tpu_custom_call.1} parent=35 // pred_check
          %p241 = pneg %p62
        $region42: #{tpu_custom_call.1} parent=35 // pred_check_branch
          %243 = sbr.rel (%p241) target = $region44
        $region43: #{tpu_custom_call.1} parent=35 // pred_region
          %p244 = scmp.lt.s32.totalorder %s16, 1
          %s245 = scalar_select %p244, %s16, 1
          %s246 = smul.addr %s245, 16
          %s247 = smul.addr %s246, 8
          %s248 = scalar_lea.vmem %s1, %s247
        $region44: #{tpu_custom_call.1} parent=35 // pred_fallthru
          _
      $region36: #{tpu_custom_call.1} parent=5 // pred_fallthru
        _
      %p249 = scmp.le.s32.totalorder 1, %s16
      %p250 = scmp.lt.s32.totalorder %s16, 3
      %p251 = pnand %p249, %p250
      %p252 = pneg %p251
      // Predicated region
      $region45: #{tpu_custom_call.1} parent=5 // pred_check
        _
      $region46: #{tpu_custom_call.1} parent=5 // pred_check_branch
        %254 = sbr.rel (%p251) target = $region48
      $region47: #{tpu_custom_call.1} parent=5 // pred_region
        %s255 = ssub.s32 %s16, 1
        %p256 = scmp.lt.s32.totalorder %s21, 1
        %s257 = scalar_select %p256, %s21, 1
        %s258 = smul.addr %s257, 8
        %s259 = smul.addr %s258, 4
        %s260 = scalar_lea.vmem %s0, %s259
        %p261 = pneg %p42
        %p262 = pneg %p39
        %p263 = scmp.lt.s32.totalorder %s21, 1
        %s264 = scalar_select %p263, %s21, 1
        %s265 = smul.addr %s264, 16
        %s266 = smul.addr %s265, 8
        %s267 = scalar_lea.vmem %s1, %s266
        %p268 = pneg %p68
        %p269 = pneg %p65
        %p270 = pneg %p89
        %p271 = pneg %p86
        %p272 = pneg %p110
        %p273 = pneg %p107
        %p274 = pneg %p131
        %p275 = pneg %p128
        %p276 = pneg %p152
        %p277 = pneg %p149
        %p278 = pneg %p173
        %p279 = pneg %p170
        %p280 = pneg %p199
        %p281 = pneg %p196
        %s282 = sand.u32 %s186, 1
        %s283 = scalar_lea.sflag [#allocation3], %s282
        %s284 = sand.u32 %s186, 1
        %s285 = scalar_lea.vmem [#allocation2], %s284
        %p286 = scmp.lt.s32.totalorder %s21, 1
        %s287 = scalar_select %p286, %s21, 1
        %s288 = smul.addr %s287, 8
        %s289 = smul.addr %s288, 4
        %s290 = scalar_lea.vmem %s0, %s289
        %p291 = scmp.lt.s32.totalorder %s21, 1
        %s292 = scalar_select %p291, %s21, 1
        %s293 = smul.addr %s292, 16
        %s294 = smul.addr %s293, 8
        %s295 = scalar_lea.vmem %s1, %s294
        %v297 = vld [vmem:[%s290] sm:$0xf]
        %v298 = vld [vmem:[%s290 + $0x4] sm:$0xf]
        %v299 = vld [vmem:[%s290 + $0x8] sm:$0xf]
        %v300 = vld [vmem:[%s290 + $0xc] sm:$0xf]
        %v301 = vld [vmem:[%s290 + $0x10] sm:$0xf]
        %v302 = vld [vmem:[%s290 + $0x14] sm:$0xf]
        %v303 = vld [vmem:[%s290 + $0x18] sm:$0xf]
        %v304 = vld [vmem:[%s290 + $0x1c] sm:$0xf]
        %v305 = vld [vmem:[%s295] sm:$0xff]
        %v306 = vld [vmem:[%s295 + $0x8] sm:$0xff]
        %v307 = vld [vmem:[%s295 + $0x10] sm:$0xff]
        %v308 = vld [vmem:[%s295 + $0x18] sm:$0xff]
        %v309 = vld [vmem:[%s295 + $0x20] sm:$0xff]
        %v310 = vld [vmem:[%s295 + $0x28] sm:$0xff]
        %v311 = vld [vmem:[%s295 + $0x30] sm:$0xff]
        %v312 = vld [vmem:[%s295 + $0x38] sm:$0xff]
        %v313 = vld [vmem:[%s295 + $0x40] sm:$0xff]
        %v314 = vld [vmem:[%s295 + $0x48] sm:$0xff]
        %v315 = vld [vmem:[%s295 + $0x50] sm:$0xff]
        %v316 = vld [vmem:[%s295 + $0x58] sm:$0xff]
        %v317 = vld [vmem:[%s295 + $0x60] sm:$0xff]
        %v318 = vld [vmem:[%s295 + $0x68] sm:$0xff]
        %v319 = vld [vmem:[%s295 + $0x70] sm:$0xff]
        %v320 = vld [vmem:[%s295 + $0x78] sm:$0xff]
        %v321 = vld [vmem:[%s2] sm:$0xf]
        %v322 = vld [vmem:[%s2 + $0x4] sm:$0xf]
        %v323 = vld [vmem:[%s2 + $0x8] sm:$0xf]
        %v324 = vld [vmem:[%s2 + $0xc] sm:$0xf]
        %v325 = vld [vmem:[%s2 + $0x10] sm:$0xf]
        %v326 = vld [vmem:[%s2 + $0x14] sm:$0xf]
        %v327 = vld [vmem:[%s2 + $0x18] sm:$0xf]
        %v328 = vld [vmem:[%s2 + $0x1c] sm:$0xf]
        %v329 = vld [vmem:[%s2 + $0x20] sm:$0xf]
        %v330 = vld [vmem:[%s2 + $0x24] sm:$0xf]
        %v331 = vld [vmem:[%s2 + $0x28] sm:$0xf]
        %v332 = vld [vmem:[%s2 + $0x2c] sm:$0xf]
        %v333 = vld [vmem:[%s2 + $0x30] sm:$0xf]
        %v334 = vld [vmem:[%s2 + $0x34] sm:$0xf]
        %v335 = vld [vmem:[%s2 + $0x38] sm:$0xf]
        %v336 = vld [vmem:[%s2 + $0x3c] sm:$0xf]
        %v337 = vld [vmem:[%s3] sm:$0xf]
        %v338 = vld [vmem:[%s3 + $0x4] sm:$0xf]
        %v339 = vld [vmem:[%s3 + $0x8] sm:$0xf]
        %v340 = vld [vmem:[%s3 + $0xc] sm:$0xf]
        %v341 = vld [vmem:[%s3 + $0x10] sm:$0xf]
        %v342 = vld [vmem:[%s3 + $0x14] sm:$0xf]
        %v343 = vld [vmem:[%s3 + $0x18] sm:$0xf]
        %v344 = vld [vmem:[%s3 + $0x1c] sm:$0xf]
        %v345 = vld [vmem:[%s3 + $0x20] sm:$0xf]
        %v346 = vld [vmem:[%s3 + $0x24] sm:$0xf]
        %v347 = vld [vmem:[%s3 + $0x28] sm:$0xf]
        %v348 = vld [vmem:[%s3 + $0x2c] sm:$0xf]
        %v349 = vld [vmem:[%s3 + $0x30] sm:$0xf]
        %v350 = vld [vmem:[%s3 + $0x34] sm:$0xf]
        %v351 = vld [vmem:[%s3 + $0x38] sm:$0xf]
        %v352 = vld [vmem:[%s3 + $0x3c] sm:$0xf]
        %v353 = vld [vmem:[%s3 + $0x40] sm:$0xf]
        %v354 = vld [vmem:[%s4] sm:$0xf]
        %v355 = vld [vmem:[%s5] sm:$0xff]
        %v356 = vld [vmem:[%s5 + $0x8] sm:$0xff]
        %v357 = vld [vmem:[%s5 + $0x10] sm:$0xff]
        %v358 = vld [vmem:[%s5 + $0x18] sm:$0xff]
        %v359 = vld [vmem:[%s5 + $0x20] sm:$0xff]
        %v360 = vld [vmem:[%s5 + $0x28] sm:$0xff]
        %v361 = vld [vmem:[%s5 + $0x30] sm:$0xff]
        %v362 = vld [vmem:[%s5 + $0x38] sm:$0xff]
        %v363 = vld [vmem:[%s5 + $0x40] sm:$0xff]
        %v364 = vld [vmem:[%s5 + $0x48] sm:$0xff]
        %v365 = vld [vmem:[%s5 + $0x50] sm:$0xff]
        %v366 = vld [vmem:[%s5 + $0x58] sm:$0xff]
        %v367 = vld [vmem:[%s5 + $0x60] sm:$0xff]
        %v368 = vld [vmem:[%s5 + $0x68] sm:$0xff]
        %v369 = vld [vmem:[%s5 + $0x70] sm:$0xff]
        %v370 = vld [vmem:[%s5 + $0x78] sm:$0xff]
        %v371 = vld [vmem:[%s6] sm:$0xff]
        %373 = vset.pattern.permute.xlu0 0
        %374 = vperm.xlu0 %373, %v305
        %v375 = vpop.permute.xlu0 %374
        %378 = vset.pattern.permute.xlu0 0
        %379 = vperm.xlu0 %378, %v306
        %v380 = vpop.permute.xlu0 %379
        %383 = vset.pattern.permute.xlu0 0
        %384 = vperm.xlu0 %383, %v307
        %v385 = vpop.permute.xlu0 %384
        %388 = vset.pattern.permute.xlu0 0
        %389 = vperm.xlu0 %388, %v308
        %v390 = vpop.permute.xlu0 %389
        %393 = vset.pattern.permute.xlu0 0
        %394 = vperm.xlu0 %393, %v309
        %v395 = vpop.permute.xlu0 %394
        %398 = vset.pattern.permute.xlu0 0
        %399 = vperm.xlu0 %398, %v310
        %v400 = vpop.permute.xlu0 %399
        %403 = vset.pattern.permute.xlu0 0
        %404 = vperm.xlu0 %403, %v311
        %v405 = vpop.permute.xlu0 %404
        %408 = vset.pattern.permute.xlu0 0
        %409 = vperm.xlu0 %408, %v312
        %v410 = vpop.permute.xlu0 %409
        %413 = vset.pattern.permute.xlu0 0
        %414 = vperm.xlu0 %413, %v313
        %v415 = vpop.permute.xlu0 %414
        %418 = vset.pattern.permute.xlu0 0
        %419 = vperm.xlu0 %418, %v314
        %v420 = vpop.permute.xlu0 %419
        %423 = vset.pattern.permute.xlu0 0
        %424 = vperm.xlu0 %423, %v315
        %v425 = vpop.permute.xlu0 %424
        %428 = vset.pattern.permute.xlu0 0
        %429 = vperm.xlu0 %428, %v316
        %v430 = vpop.permute.xlu0 %429
        %433 = vset.pattern.permute.xlu0 0
        %434 = vperm.xlu0 %433, %v317
        %v435 = vpop.permute.xlu0 %434
        %438 = vset.pattern.permute.xlu0 0
        %439 = vperm.xlu0 %438, %v318
        %v440 = vpop.permute.xlu0 %439
        %443 = vset.pattern.permute.xlu0 0
        %444 = vperm.xlu0 %443, %v319
        %v445 = vpop.permute.xlu0 %444
        %448 = vset.pattern.permute.xlu0 0
        %449 = vperm.xlu0 %448, %v320
        %v450 = vpop.permute.xlu0 %449
        %v468 = vunpack.c.l.b16 %v321
        %v469 = vunpack.c.l.b16 %v322
        %v470 = vunpack.c.l.b16 %v323
        %v471 = vunpack.c.l.b16 %v324
        %v472 = vunpack.c.l.b16 %v325
        %v473 = vunpack.c.l.b16 %v326
        %v474 = vunpack.c.l.b16 %v327
        %v475 = vunpack.c.l.b16 %v328
        %v476 = vunpack.c.l.b16 %v329
        %v477 = vunpack.c.l.b16 %v330
        %v478 = vunpack.c.l.b16 %v331
        %v479 = vunpack.c.l.b16 %v332
        %v480 = vunpack.c.l.b16 %v333
        %v481 = vunpack.c.l.b16 %v334
        %v482 = vunpack.c.l.b16 %v335
        %v483 = vunpack.c.l.b16 %v336
        %v484 = vpack.c.b16 %v469, %v468
        %v485 = vpack.c.b16 %v471, %v470
        %v486 = vpack.c.b16 %v473, %v472
        %v487 = vpack.c.b16 %v475, %v474
        %v488 = vpack.c.b16 %v477, %v476
        %v489 = vpack.c.b16 %v479, %v478
        %v490 = vpack.c.b16 %v481, %v480
        %v491 = vpack.c.b16 %v483, %v482
        %v500 = vunpack.c.l.b16 %v297
        %v501 = vunpack.c.l.b16 %v298
        %v502 = vunpack.c.l.b16 %v299
        %v503 = vunpack.c.l.b16 %v300
        %v504 = vunpack.c.l.b16 %v301
        %v505 = vunpack.c.l.b16 %v302
        %v506 = vunpack.c.l.b16 %v303
        %v507 = vunpack.c.l.b16 %v304
        %v508 = vpack.c.b16 %v501, %v500
        %v509 = vpack.c.b16 %v503, %v502
        %v510 = vpack.c.b16 %v505, %v504
        %v511 = vpack.c.b16 %v507, %v506
        %vm516 = vcmask 523264
        %v518 = vsel %vm516, %v484, 0
        %v521 = vsel %vm516, %v485, 0
        %v524 = vsel %vm516, %v486, 0
        %v527 = vsel %vm516, %v487, 0
        %v530 = vsel %vm516, %v488, 0
        %v533 = vsel %vm516, %v489, 0
        %v536 = vsel %vm516, %v490, 0
        %v539 = vsel %vm516, %v491, 0
        %541 = vmatprep.subr.bf16.mxu0 0
        %542 = vmatpush1.bf16.msra.mxu0 0
        %543 = vmatprep.subr.bf16.mxu0 0
        %544 = vmatpush1.bf16.msra.mxu0 0
        %545 = vmatprep.subr.bf16.mxu0 0
        %546 = vmatpush1.bf16.msra.mxu0 0
        %547 = vmatprep.subr.bf16.mxu0 0
        %548 = vmatpush1.bf16.msra.mxu0 0
        %549 = vmatprep.subr.bf16.mxu0 0
        %550 = vmatpush1.bf16.msra.mxu0 %v511
        %551 = vmatprep.subr.bf16.mxu0 0
        %552 = vmatpush1.bf16.msra.mxu0 %v510
        %553 = vmatprep.subr.bf16.mxu0 0
        %554 = vmatpush1.bf16.msra.mxu0 %v509
        %555 = vmatprep.subr.bf16.mxu0 0
        %556 = vmatpush1.bf16.msra.mxu0 %v508
        %557 = vmatprep.subr.bf16.mxu0 0
        %558 = vmatpush2.bf16.msra.mxu0 0
        %559 = vmatprep.subr.bf16.mxu0 0
        %560 = vmatpush2.bf16.msra.mxu0 0
        %561 = vmatprep.subr.bf16.mxu0 0
        %562 = vmatpush2.bf16.msra.mxu0 0
        %563 = vmatprep.subr.bf16.mxu0 0
        %564 = vmatpush2.bf16.msra.mxu0 0
        %565 = vmatprep.subr.bf16.mxu0 0
        %566 = vmatpush2.bf16.msra.mxu0 0
        %567 = vmatprep.subr.bf16.mxu0 0
        %568 = vmatpush2.bf16.msra.mxu0 0
        %569 = vmatprep.subr.bf16.mxu0 0
        %570 = vmatpush2.bf16.msra.mxu0 0
        %571 = vmatprep.subr.bf16.mxu0 0
        %572 = vmatpush2.bf16.msra.mxu0 0
        %573 = vmatprep.mubr.bf16.mxu0 0
        %574 = vmatmul.mubr.bf16.gmra.mxu0 %v518
        %v575 = vpop.f32.mrf.mxu0
        %v576 = vadd.f32 %v375, %v575
        %v577 = vpop.f32.mrf.mxu0
        %v578 = vpop.f32.mrf.mxu0
        %v579 = vadd.f32 %v380, %v578
        %v580 = vpop.f32.mrf.mxu0
        %581 = vmatprep.mubr.bf16.mxu0 0
        %582 = vmatmul.mubr.bf16.gmra.mxu0 %v521
        %v583 = vpop.f32.mrf.mxu0
        %v584 = vadd.f32 %v385, %v583
        %v585 = vpop.f32.mrf.mxu0
        %v586 = vpop.f32.mrf.mxu0
        %v587 = vadd.f32 %v390, %v586
        %v588 = vpop.f32.mrf.mxu0
        %589 = vmatprep.mubr.bf16.mxu0 0
        %590 = vmatmul.mubr.bf16.gmra.mxu0 %v524
        %v591 = vpop.f32.mrf.mxu0
        %v592 = vadd.f32 %v395, %v591
        %v593 = vpop.f32.mrf.mxu0
        %v594 = vpop.f32.mrf.mxu0
        %v595 = vadd.f32 %v400, %v594
        %v596 = vpop.f32.mrf.mxu0
        %597 = vmatprep.mubr.bf16.mxu0 0
        %598 = vmatmul.mubr.bf16.gmra.mxu0 %v527
        %v599 = vpop.f32.mrf.mxu0
        %v600 = vadd.f32 %v405, %v599
        %v601 = vpop.f32.mrf.mxu0
        %v602 = vpop.f32.mrf.mxu0
        %v603 = vadd.f32 %v410, %v602
        %v604 = vpop.f32.mrf.mxu0
        %605 = vmatprep.mubr.bf16.mxu0 0
        %606 = vmatmul.mubr.bf16.gmra.mxu0 %v530
        %v607 = vpop.f32.mrf.mxu0
        %v608 = vadd.f32 %v415, %v607
        %v609 = vpop.f32.mrf.mxu0
        %v610 = vpop.f32.mrf.mxu0
        %v611 = vadd.f32 %v420, %v610
        %v612 = vpop.f32.mrf.mxu0
        %613 = vmatprep.mubr.bf16.mxu0 0
        %614 = vmatmul.mubr.bf16.gmra.mxu0 %v533
        %v615 = vpop.f32.mrf.mxu0
        %v616 = vadd.f32 %v425, %v615
        %v617 = vpop.f32.mrf.mxu0
        %v618 = vpop.f32.mrf.mxu0
        %v619 = vadd.f32 %v430, %v618
        %v620 = vpop.f32.mrf.mxu0
        %621 = vmatprep.mubr.bf16.mxu0 0
        %622 = vmatmul.mubr.bf16.gmra.mxu0 %v536
        %v623 = vpop.f32.mrf.mxu0
        %v624 = vadd.f32 %v435, %v623
        %v625 = vpop.f32.mrf.mxu0
        %v626 = vpop.f32.mrf.mxu0
        %v627 = vadd.f32 %v440, %v626
        %v628 = vpop.f32.mrf.mxu0
        %629 = vmatprep.mubr.bf16.mxu0 0
        %630 = vmatmul.mubr.bf16.gmra.mxu0 %v539
        %v631 = vpop.f32.mrf.mxu0
        %v632 = vadd.f32 %v445, %v631
        %v633 = vpop.f32.mrf.mxu0
        %v634 = vpop.f32.mrf.mxu0
        %v635 = vadd.f32 %v450, %v634
        %v636 = vpop.f32.mrf.mxu0
        %637 = vdwg.mxu0
        %v638 = vmax.f32 %v576, %v592
        %v639 = vmax.f32 %v579, %v595
        %v640 = vmax.f32 %v584, %v600
        %v641 = vmax.f32 %v587, %v603
        %v642 = vmax.f32 %v638, %v608
        %v643 = vmax.f32 %v639, %v611
        %v644 = vmax.f32 %v640, %v616
        %v645 = vmax.f32 %v641, %v619
        %v646 = vmax.f32 %v642, %v624
        %v647 = vmax.f32 %v643, %v627
        %v648 = vmax.f32 %v644, %v632
        %v649 = vmax.f32 %v645, %v635
        %v650 = vpack.c.bf16 %v647, %v646
        %v651 = vpack.c.bf16 %v649, %v648
        %v669 = vunpack.c.l.b16 %v337
        %v670 = vunpack.c.l.b16 %v338
        %v671 = vunpack.c.l.b16 %v339
        %v672 = vunpack.c.l.b16 %v340
        %v673 = vunpack.c.l.b16 %v341
        %v674 = vunpack.c.l.b16 %v342
        %v675 = vunpack.c.l.b16 %v343
        %v676 = vunpack.c.l.b16 %v344
        %v677 = vunpack.c.l.b16 %v345
        %v678 = vunpack.c.l.b16 %v346
        %v679 = vunpack.c.l.b16 %v347
        %v680 = vunpack.c.l.b16 %v348
        %v681 = vunpack.c.l.b16 %v349
        %v682 = vunpack.c.l.b16 %v350
        %v683 = vunpack.c.l.b16 %v351
        %v684 = vunpack.c.l.b16 %v352
        %v685 = vunpack.c.l.b16 %v353
        %v686 = vpack.c.b16 %v670, %v669
        %v687 = vpack.c.b16 %v672, %v671
        %v688 = vpack.c.b16 %v674, %v673
        %v689 = vpack.c.b16 %v676, %v675
        %v690 = vpack.c.b16 %v678, %v677
        %v691 = vpack.c.b16 %v680, %v679
        %v692 = vpack.c.b16 %v682, %v681
        %v693 = vpack.c.b16 %v684, %v683
        %v694 = vpack.c.b16 %v685, %v685
        %vm695 = vcmask 261120
        %v697 = vsel %vm695, %v686, 0
        %v700 = vsel %vm695, %v687, 0
        %v703 = vsel %vm695, %v688, 0
        %v706 = vsel %vm695, %v689, 0
        %v709 = vsel %vm695, %v690, 0
        %v712 = vsel %vm695, %v691, 0
        %v715 = vsel %vm695, %v692, 0
        %v718 = vsel %vm695, %v693, 0
        %v721 = vsel %vm695, %v694, 0
        %723 = vmatprep.subr.bf16.mxu0 0
        %724 = vmatpush1.bf16.msra.mxu0 0
        %725 = vmatprep.subr.bf16.mxu0 0
        %726 = vmatpush1.bf16.msra.mxu0 0
        %727 = vmatprep.subr.bf16.mxu0 0
        %728 = vmatpush1.bf16.msra.mxu0 0
        %729 = vmatprep.subr.bf16.mxu0 0
        %730 = vmatpush1.bf16.msra.mxu0 0
        %731 = vmatprep.subr.bf16.mxu0 0
        %732 = vmatpush1.bf16.msra.mxu0 0
        %733 = vmatprep.subr.bf16.mxu0 0
        %734 = vmatpush1.bf16.msra.mxu0 0
        %735 = vmatprep.subr.bf16.mxu0 0
        %736 = vmatpush1.bf16.msra.mxu0 %v651
        %737 = vmatprep.subr.bf16.mxu0 0
        %738 = vmatpush1.bf16.msra.mxu0 %v650
        %739 = vmatprep.subr.bf16.mxu0 0
        %740 = vmatpush2.bf16.msra.mxu0 0
        %741 = vmatprep.subr.bf16.mxu0 0
        %742 = vmatpush2.bf16.msra.mxu0 0
        %743 = vmatprep.subr.bf16.mxu0 0
        %744 = vmatpush2.bf16.msra.mxu0 0
        %745 = vmatprep.subr.bf16.mxu0 0
        %746 = vmatpush2.bf16.msra.mxu0 0
        %747 = vmatprep.subr.bf16.mxu0 0
        %748 = vmatpush2.bf16.msra.mxu0 0
        %749 = vmatprep.subr.bf16.mxu0 0
        %750 = vmatpush2.bf16.msra.mxu0 0
        %751 = vmatprep.subr.bf16.mxu0 0
        %752 = vmatpush2.bf16.msra.mxu0 0
        %753 = vmatprep.subr.bf16.mxu0 0
        %754 = vmatpush2.bf16.msra.mxu0 0
        %755 = vmatprep.mubr.bf16.mxu0 0
        %756 = vmatmul.mubr.bf16.gmra.mxu0 %v697
        %v757 = vpop.f32.mrf.mxu0
        %v758 = vadd.f32 0.0, %v757
        %v759 = vpop.f32.mrf.mxu0
        %v760 = vpop.f32.mrf.mxu0
        %v761 = vadd.f32 0.0, %v760
        %v762 = vpop.f32.mrf.mxu0
        %763 = vmatprep.mubr.bf16.mxu0 0
        %764 = vmatmul.mubr.bf16.gmra.mxu0 %v700
        %v765 = vpop.f32.mrf.mxu0
        %v766 = vadd.f32 0.0, %v765
        %v767 = vpop.f32.mrf.mxu0
        %v768 = vpop.f32.mrf.mxu0
        %v769 = vadd.f32 0.0, %v768
        %v770 = vpop.f32.mrf.mxu0
        %771 = vmatprep.mubr.bf16.mxu0 0
        %772 = vmatmul.mubr.bf16.gmra.mxu0 %v703
        %v773 = vpop.f32.mrf.mxu0
        %v774 = vadd.f32 0.0, %v773
        %v775 = vpop.f32.mrf.mxu0
        %v776 = vpop.f32.mrf.mxu0
        %v777 = vadd.f32 0.0, %v776
        %v778 = vpop.f32.mrf.mxu0
        %779 = vmatprep.mubr.bf16.mxu0 0
        %780 = vmatmul.mubr.bf16.gmra.mxu0 %v706
        %v781 = vpop.f32.mrf.mxu0
        %v782 = vadd.f32 0.0, %v781
        %v783 = vpop.f32.mrf.mxu0
        %v784 = vpop.f32.mrf.mxu0
        %v785 = vadd.f32 0.0, %v784
        %v786 = vpop.f32.mrf.mxu0
        %787 = vmatprep.mubr.bf16.mxu0 0
        %788 = vmatmul.mubr.bf16.gmra.mxu0 %v709
        %v789 = vpop.f32.mrf.mxu0
        %v790 = vadd.f32 0.0, %v789
        %v791 = vpop.f32.mrf.mxu0
        %v792 = vpop.f32.mrf.mxu0
        %v793 = vadd.f32 0.0, %v792
        %v794 = vpop.f32.mrf.mxu0
        %795 = vmatprep.mubr.bf16.mxu0 0
        %796 = vmatmul.mubr.bf16.gmra.mxu0 %v712
        %v797 = vpop.f32.mrf.mxu0
        %v798 = vadd.f32 0.0, %v797
        %v799 = vpop.f32.mrf.mxu0
        %v800 = vpop.f32.mrf.mxu0
        %v801 = vadd.f32 0.0, %v800
        %v802 = vpop.f32.mrf.mxu0
        %803 = vmatprep.mubr.bf16.mxu0 0
        %804 = vmatmul.mubr.bf16.gmra.mxu0 %v715
        %v805 = vpop.f32.mrf.mxu0
        %v806 = vadd.f32 0.0, %v805
        %v807 = vpop.f32.mrf.mxu0
        %v808 = vpop.f32.mrf.mxu0
        %v809 = vadd.f32 0.0, %v808
        %v810 = vpop.f32.mrf.mxu0
        %811 = vmatprep.mubr.bf16.mxu0 0
        %812 = vmatmul.mubr.bf16.gmra.mxu0 %v718
        %v813 = vpop.f32.mrf.mxu0
        %v814 = vadd.f32 0.0, %v813
        %v815 = vpop.f32.mrf.mxu0
        %v816 = vpop.f32.mrf.mxu0
        %v817 = vadd.f32 0.0, %v816
        %v818 = vpop.f32.mrf.mxu0
        %819 = vmatprep.mubr.bf16.mxu0 0
        %820 = vmatmul.mubr.bf16.gmra.mxu0 %v721
        %v821 = vpop.f32.mrf.mxu0
        %v822 = vadd.f32 0.0, %v821
        %v823 = vpop.f32.mrf.mxu0
        %v824 = vpop.f32.mrf.mxu0
        %v825 = vpop.f32.mrf.mxu0
        %826 = vdwg.mxu0
        %828 = vset.pattern.permute.xlu0 0
        %829 = vperm.xlu0 %828, %v355
        %v830 = vpop.permute.xlu0 %829
        %833 = vset.pattern.permute.xlu0 0
        %834 = vperm.xlu0 %833, %v356
        %v835 = vpop.permute.xlu0 %834
        %838 = vset.pattern.permute.xlu0 0
        %839 = vperm.xlu0 %838, %v357
        %v840 = vpop.permute.xlu0 %839
        %843 = vset.pattern.permute.xlu0 0
        %844 = vperm.xlu0 %843, %v358
        %v845 = vpop.permute.xlu0 %844
        %848 = vset.pattern.permute.xlu0 0
        %849 = vperm.xlu0 %848, %v359
        %v850 = vpop.permute.xlu0 %849
        %853 = vset.pattern.permute.xlu0 0
        %854 = vperm.xlu0 %853, %v360
        %v855 = vpop.permute.xlu0 %854
        %858 = vset.pattern.permute.xlu0 0
        %859 = vperm.xlu0 %858, %v361
        %v860 = vpop.permute.xlu0 %859
        %863 = vset.pattern.permute.xlu0 0
        %864 = vperm.xlu0 %863, %v362
        %v865 = vpop.permute.xlu0 %864
        %868 = vset.pattern.permute.xlu0 0
        %869 = vperm.xlu0 %868, %v363
        %v870 = vpop.permute.xlu0 %869
        %873 = vset.pattern.permute.xlu0 0
        %874 = vperm.xlu0 %873, %v364
        %v875 = vpop.permute.xlu0 %874
        %878 = vset.pattern.permute.xlu0 0
        %879 = vperm.xlu0 %878, %v365
        %v880 = vpop.permute.xlu0 %879
        %883 = vset.pattern.permute.xlu0 0
        %884 = vperm.xlu0 %883, %v366
        %v885 = vpop.permute.xlu0 %884
        %888 = vset.pattern.permute.xlu0 0
        %889 = vperm.xlu0 %888, %v367
        %v890 = vpop.permute.xlu0 %889
        %893 = vset.pattern.permute.xlu0 0
        %894 = vperm.xlu0 %893, %v368
        %v895 = vpop.permute.xlu0 %894
        %898 = vset.pattern.permute.xlu0 0
        %899 = vperm.xlu0 %898, %v369
        %v900 = vpop.permute.xlu0 %899
        %903 = vset.pattern.permute.xlu0 0
        %904 = vperm.xlu0 %903, %v370
        %v905 = vpop.permute.xlu0 %904
        %v907 = vadd.f32 %v758, %v830
        %v908 = vadd.f32 %v761, %v835
        %v909 = vadd.f32 %v766, %v840
        %v910 = vadd.f32 %v769, %v845
        %v911 = vadd.f32 %v774, %v850
        %v912 = vadd.f32 %v777, %v855
        %v913 = vadd.f32 %v782, %v860
        %v914 = vadd.f32 %v785, %v865
        %v915 = vadd.f32 %v790, %v870
        %v916 = vadd.f32 %v793, %v875
        %v917 = vadd.f32 %v798, %v880
        %v918 = vadd.f32 %v801, %v885
        %v919 = vadd.f32 %v806, %v890
        %v920 = vadd.f32 %v809, %v895
        %v921 = vadd.f32 %v814, %v900
        %v922 = vadd.f32 %v817, %v905
        %v923 = vmax.f32 %v907, %v911
        %v924 = vmax.f32 %v908, %v912
        %v925 = vmax.f32 %v909, %v913
        %v926 = vmax.f32 %v910, %v914
        %v927 = vmax.f32 %v923, %v915
        %v928 = vmax.f32 %v924, %v916
        %v929 = vmax.f32 %v925, %v917
        %v930 = vmax.f32 %v926, %v918
        %v931 = vmax.f32 %v927, %v919
        %v932 = vmax.f32 %v928, %v920
        %v933 = vmax.f32 %v929, %v921
        %v934 = vmax.f32 %v930, %v922
        %v935 = vpack.c.bf16 %v932, %v931
        %v936 = vpack.c.bf16 %v934, %v933
        %v938 = vsel %vm695, %v354, 0
        %940 = vmatprep.subr.bf16.mxu0 0
        %941 = vmatpush1.bf16.msra.mxu0 0
        %942 = vmatprep.subr.bf16.mxu0 0
        %943 = vmatpush1.bf16.msra.mxu0 0
        %944 = vmatprep.subr.bf16.mxu0 0
        %945 = vmatpush1.bf16.msra.mxu0 0
        %946 = vmatprep.subr.bf16.mxu0 0
        %947 = vmatpush1.bf16.msra.mxu0 0
        %948 = vmatprep.subr.bf16.mxu0 0
        %949 = vmatpush1.bf16.msra.mxu0 0
        %950 = vmatprep.subr.bf16.mxu0 0
        %951 = vmatpush1.bf16.msra.mxu0 0
        %952 = vmatprep.subr.bf16.mxu0 0
        %953 = vmatpush1.bf16.msra.mxu0 %v936
        %954 = vmatprep.subr.bf16.mxu0 0
        %955 = vmatpush1.bf16.msra.mxu0 %v935
        %956 = vmatprep.subr.bf16.mxu0 0
        %957 = vmatpush2.bf16.msra.mxu0 0
        %958 = vmatprep.subr.bf16.mxu0 0
        %959 = vmatpush2.bf16.msra.mxu0 0
        %960 = vmatprep.subr.bf16.mxu0 0
        %961 = vmatpush2.bf16.msra.mxu0 0
        %962 = vmatprep.subr.bf16.mxu0 0
        %963 = vmatpush2.bf16.msra.mxu0 0
        %964 = vmatprep.subr.bf16.mxu0 0
        %965 = vmatpush2.bf16.msra.mxu0 0
        %966 = vmatprep.subr.bf16.mxu0 0
        %967 = vmatpush2.bf16.msra.mxu0 0
        %968 = vmatprep.subr.bf16.mxu0 0
        %969 = vmatpush2.bf16.msra.mxu0 0
        %970 = vmatprep.subr.bf16.mxu0 0
        %971 = vmatpush2.bf16.msra.mxu0 0
        %972 = vmatprep.mubr.bf16.mxu0 0
        %973 = vmatmul.mubr.bf16.gmra.mxu0 %v938
        %v974 = vpop.f32.mrf.mxu0
        %v975 = vadd.f32 0.0, %v974
        %v976 = vpop.f32.mrf.mxu0
        %v977 = vpop.f32.mrf.mxu0
        %v978 = vpop.f32.mrf.mxu0
        %979 = vdwg.mxu0
        %v980 = vadd.f32 %v822, %v975
        %982 = vset.pattern.permute.xlu0 0
        %983 = vperm.xlu0 %982, %v371
        %v984 = vpop.permute.xlu0 %983
        %v986 = vadd.f32 %v980, %v984
        %v987 = vrot.slane %v986, 4
        %v988 = vmax.f32 %v986, %v987
        %v989 = vrot.slane %v988, 2
        %v990 = vmax.f32 %v988, %v989
        %v991 = vrot.slane %v990, 1
        %v992 = vmax.f32 %v990, %v991
        %v993 = vlaneseq
        %v994 = vand.u32 %v993, 127
        %vm995 = vcmp.lt.s32.totalorder %v994, 8
        %v996 = vsel %vm995, 0.0, -1e+30
        %v997 = vadd.f32 %v992, %v996
        %998 = vmax.xlane.f32.xlu0 %v997
        %v999 = vpop.xlane.xlu0 %998
        %v1000 = vsub.f32 %v997, %v999
        %v1001 = vmul.f32 %v1000, 1.442695
        %v1002 = vpow.pop %v1001
        %1003 = vadd.xlane.f32.xlu0 %v1002
        %v1004 = vpop.xlane.xlu0 %1003
        %v1005 = vlog2.pop %v1004
        %v1006 = vmul.f32 %v1005, 0.6931472
        %v1007 = vsub.f32 %v1000, %v1006
        %1008 = vst [vmem:[%s285] sm:$0x1] %v1007
        %s1009 = sand.u32 %s186, 1
        %s1010 = scalar_lea.sflag [#allocation3], %s1009
        %s1011 = sand.u32 %s186, 1
        %s1012 = scalar_lea.vmem [#allocation2], %s1011
        // Predicated region
        $region49: #{tpu_custom_call.1} parent=47 // pred_check
          %p1013 = pneg %p196
        $region50: #{tpu_custom_call.1} parent=47 // pred_check_branch
          %1015 = sbr.rel (%p1013) target = $region52
        $region51: #{tpu_custom_call.1} parent=47 // pred_region
          %s1017 = ssub.s32 16, 16
          %1018 = vsyncadd %s1010, %s1017
          %s1019 = smul.addr %s21, 16
          %s1020 = scalar_lea.hbm %s7, %s1019
          %s1022 = sshll.u32 %s1012, 4
          %s1023 = int_to_ptr.vmem [resolvable:$true] %s1022
          %1025 = dma.vmem_to_hbm [thread:$0]  %s1023, 16, %s1020, %s1010
        $region52: #{tpu_custom_call.1} parent=47 // pred_fallthru
          _
      $region48: #{tpu_custom_call.1} parent=5 // pred_fallthru
        _
      %p1026 = scmp.le.s32.totalorder 2, %s16
      // Predicated region
      $region53: #{tpu_custom_call.1} parent=5 // pred_check
        %p1027 = pneg %p1026
      $region54: #{tpu_custom_call.1} parent=5 // pred_check_branch
        %1029 = sbr.rel (%p1027) target = $region56
      $region55: #{tpu_custom_call.1} parent=5 // pred_region
        %s1030 = ssub.s32 %s16, 2
        // Predicated region
        $region57: #{tpu_custom_call.1} parent=55 // pred_check
          %p1031 = pneg %p202
        $region58: #{tpu_custom_call.1} parent=55 // pred_check_branch
          %1033 = sbr.rel (%p1031) target = $region60
        $region59: #{tpu_custom_call.1} parent=55 // pred_region
          %s1034 = sand.u32 %s187, 1
          %s1035 = scalar_lea.sflag [#allocation3], %s1034
          %s1036 = sand.u32 %s187, 1
          %s1037 = scalar_lea.vmem [#allocation2], %s1036
          %1038 = dma.done %s1035, 16
        $region60: #{tpu_custom_call.1} parent=55 // pred_fallthru
          _
      $region56: #{tpu_custom_call.1} parent=5 // pred_fallthru
        _
    $region6: #{tpu_custom_call.1} parent=1 // loop_footer
      %s20 = sadd.s32 1, %s16
    $region7: #{tpu_custom_call.1} parent=1 // loop_footer_branch
      %15 = sbr.rel target = $region3
    $region8: #{tpu_custom_call.1} parent=1 // loop_exit
      _
    %1039 = vsyncpa [#allocation3], 1
    %s1040 = scalar_lea.sflag [#allocation3], 1
    %1041 = vsyncpa %s1040, 1

</llo_original>
